<compile_context>
chip_gen: v5e
topology: v5e:2x2
jax: 0.10.0
libtpu: 0.0.40
codegen_flags: <defaults>
</compile_context>

<pallas_src>
import functools

import jax
import jax.numpy as jnp
from jax import lax
from jax.experimental import pallas as pl
from jax.experimental.pallas import tpu as pltpu


def _round_up(x, m):
    return ((x + m - 1) // m) * m


def _choose_tq(HW, C, NPAD, attn_bytes, budget_bytes):
    """Largest q-row tile (divisor of HW, multiple of 8) fitting the VMEM budget."""
    # Fixed VMEM: double-buffered x, bf16 qkv scratch + f32 projection temp,
    # double-buffered fused weight, biases.
    fixed = (2 * HW * C * 4 + HW * NPAD * 2 + HW * NPAD * 4
             + 2 * C * NPAD * 2 + 2 * NPAD * 4)
    cands = [t for t in range(HW, 0, -1)
             if HW % t == 0 and (t % 8 == 0 or t == HW)]
    for tq in cands:
        # out tile (x2), attn tile (x2), s/e/a + softmax temporaries.
        per_tile = 2 * tq * C * 4 + 2 * tq * HW * attn_bytes + 6 * tq * HW * 4
        if fixed + per_tile <= budget_bytes:
            return tq
    return cands[-1]


# ---------------------------------------------------------------------------
# Fused self-attention kernel: grid = (batch, q-row tile).
# ---------------------------------------------------------------------------
def _attn_kernel(gamma_ref, x_ref, wqkv_ref, bqkv_ref, out_ref, attn_ref,
                 qkv_ref, *, C, SEG, SEGV, TQ):
    qi = pl.program_id(1)

    # Fused q|k|v projection for the whole image, once per batch element.
    # bf16 operands, f32 accumulation, f32 bias add, stored as bf16 scratch.
    @pl.when(qi == 0)
    def _():
        xb = x_ref[...].astype(jnp.bfloat16)
        qkv = jnp.dot(xb, wqkv_ref[...], preferred_element_type=jnp.float32)
        qkv_ref[...] = (qkv + bqkv_ref[...]).astype(jnp.bfloat16)

    row0 = pl.multiple_of(qi * TQ, TQ)
    q = qkv_ref[pl.ds(row0, TQ), pl.ds(0, SEG)]          # (TQ, SEG)  bf16
    k = qkv_ref[:, pl.ds(SEG, SEG)]                      # (HW, SEG)  bf16
    v = qkv_ref[:, pl.ds(2 * SEG, SEGV)]                 # (HW, SEGV) bf16

    # Scores: contract the (zero-padded) C//8 axis; bf16 on the MXU, f32 acc.
    s = lax.dot_general(q, k, dimension_numbers=(((1,), (1,)), ((), ())),
                        preferred_element_type=jnp.float32)          # (TQ, HW)
    s = s - jnp.max(s, axis=-1, keepdims=True)
    e = jnp.exp(s)
    # Exact normalization: the attention map is a module output (rows sum to 1).
    a = e / jnp.sum(e, axis=-1, keepdims=True)
    attn_ref[...] = a.astype(attn_ref.dtype)

    # out = gamma * (a @ v) + x   (lane-dense: last dim is C)
    o = jnp.dot(a.astype(jnp.bfloat16), v, preferred_element_type=jnp.float32)
    if SEGV != C:
        o = o[:, :C]
    x_tile = x_ref[pl.ds(row0, TQ), :]
    out_ref[...] = (gamma_ref[0] * o + x_tile).astype(out_ref.dtype)


def attn_forward(params, x, attn_dtype=jnp.float32,
                 vmem_budget_bytes=40 * 1024 * 1024):
    """SAGAN Attn forward.  x: (B, C, W, H) f32.  Returns (out, attention)."""
    B, C, W, H = x.shape
    HW = W * H
    C8 = C // 8
    SEG = _round_up(C8, 128)          # q / k segment width (lane-padded)
    SEGV = _round_up(C, 128)          # v segment width (lane-padded)
    NPAD = 2 * SEG + SEGV
    attn_bytes = jnp.dtype(attn_dtype).itemsize
    TQ = _choose_tq(HW, C, NPAD, attn_bytes, vmem_budget_bytes)
    num_q = HW // TQ

    # NCHW -> (B, HW, C): channels on the lane axis.
    # TODO(synk): in-network use should keep the (B, HW, C) layout end-to-end
    # and drop these two transposes (each is a full extra HBM pass).
    x_hw = x.transpose(0, 2, 3, 1).reshape(B, HW, C).astype(jnp.float32)

    # Fused, lane-padded Wq^T | Wk^T | Wv^T weight and bias (padding is zero,
    # so padded q/k columns contribute exactly 0 to the score contraction).
    wq = params["wq"].reshape(C8, C).astype(jnp.float32)
    wk = params["wk"].reshape(C8, C).astype(jnp.float32)
    wv = params["wv"].reshape(C, C).astype(jnp.float32)
    w_qkv = jnp.zeros((C, NPAD), jnp.float32)
    w_qkv = w_qkv.at[:, 0:C8].set(wq.T)
    w_qkv = w_qkv.at[:, SEG:SEG + C8].set(wk.T)
    w_qkv = w_qkv.at[:, 2 * SEG:2 * SEG + C].set(wv.T)
    w_qkv = w_qkv.astype(jnp.bfloat16)

    b_qkv = jnp.zeros((1, NPAD), jnp.float32)
    b_qkv = b_qkv.at[0, 0:C8].set(params["bq"].astype(jnp.float32))
    b_qkv = b_qkv.at[0, SEG:SEG + C8].set(params["bk"].astype(jnp.float32))
    b_qkv = b_qkv.at[0, 2 * SEG:2 * SEG + C].set(params["bv"].astype(jnp.float32))

    gamma = params["gamma"].reshape(1).astype(jnp.float32)   # scalar -> SMEM

    kernel = functools.partial(_attn_kernel, C=C, SEG=SEG, SEGV=SEGV, TQ=TQ)

    out_hw, attn = pl.pallas_call(
        kernel,
        out_shape=(jax.ShapeDtypeStruct((B, HW, C), jnp.float32),
                   jax.ShapeDtypeStruct((B, HW, HW), attn_dtype)),
        grid_spec=pltpu.PrefetchScalarGridSpec(
            num_scalar_prefetch=0,
            grid=(B, num_q),
            in_specs=[
                pl.BlockSpec(memory_space=pltpu.MemorySpace.SMEM),     # gamma
                # x stays resident across the q-tile axis (index only moves
                # with b), so it is DMA'd once per batch element.
                pl.BlockSpec((None, HW, C), lambda b, q: (b, 0, 0)),   # x
                pl.BlockSpec((C, NPAD), lambda b, q: (0, 0)),          # W_qkv^T
                pl.BlockSpec((1, NPAD), lambda b, q: (0, 0)),          # b_qkv
            ],
            out_specs=[
                pl.BlockSpec((None, TQ, C), lambda b, q: (b, q, 0)),   # out tile
                pl.BlockSpec((None, TQ, HW), lambda b, q: (b, q, 0)),  # attn tile
            ],
            scratch_shapes=[pltpu.VMEM((HW, NPAD), jnp.bfloat16)],     # q|k|v
        ),
        compiler_params=pltpu.CompilerParams(
            dimension_semantics=("parallel", "arbitrary"),
            vmem_limit_bytes=56 * 1024 * 1024),
    )(gamma, x_hw, w_qkv, b_qkv)

    # Back to the module's NCHW interface.
    out = out_hw.transpose(0, 2, 1).reshape(B, C, W, H)
    return out, attn


# ---------------------------------------------------------------------------
# Pure-JAX reference (f32) for a correctness check.
# ---------------------------------------------------------------------------
def attn_reference(params, x):
    B, C, W, H = x.shape
    HW = W * H
    C8 = C // 8
    hp = lax.Precision.HIGHEST
    xf = x.reshape(B, C, HW).astype(jnp.float32)
    wq = params["wq"].reshape(C8, C)
    wk = params["wk"].reshape(C8, C)
    wv = params["wv"].reshape(C, C)
    q = jnp.einsum("mc,bcp->bpm", wq, xf, precision=hp) + params["bq"][None, None, :]
    k = jnp.einsum("mc,bcp->bmp", wk, xf, precision=hp) + params["bk"][None, :, None]
    v = jnp.einsum("mc,bcp->bmp", wv, xf, precision=hp) + params["bv"][None, :, None]
    s = jnp.einsum("bim,bmj->bij", q, k, precision=hp)
    a = jax.nn.softmax(s, axis=-1)
    o = jnp.einsum("bcj,bij->bci", v, a, precision=hp)
    out = params["gamma"].reshape(()) * o + xf
    return out.reshape(B, C, W, H), a


if __name__ == "__main__":
    key = jax.random.PRNGKey(0)
    kx, kq, kk, kv, kbq, kbk, kbv = jax.random.split(key, 7)

    B, C, W, H = 2, 128, 8, 8            # small shapes; C must be divisible by 8
    C8 = C // 8
    x = jax.random.normal(kx, (B, C, W, H), dtype=jnp.float32)
    params = {
        "wq": 0.05 * jax.random.normal(kq, (C8, C, 1, 1), jnp.float32),
        "bq": 0.05 * jax.random.normal(kbq, (C8,), jnp.float32),
        "wk": 0.05 * jax.random.normal(kk, (C8, C, 1, 1), jnp.float32),
        "bk": 0.05 * jax.random.normal(kbk, (C8,), jnp.float32),
        "wv": 0.05 * jax.random.normal(kv, (C, C, 1, 1), jnp.float32),
        "bv": 0.05 * jax.random.normal(kbv, (C,), jnp.float32),
        # torch inits gamma=0 (attention branch would be a no-op);
        # use a nonzero value so the attention path is exercised.
        "gamma": jnp.array([0.5], jnp.float32),
    }

    out, attn = jax.jit(attn_forward)(params, x)
    out, attn = jax.block_until_ready((out, attn))

    assert out.shape == (B, C, W, H), out.shape
    assert attn.shape == (B, W * H, W * H), attn.shape
    assert bool(jnp.all(jnp.isfinite(out))) and bool(jnp.all(jnp.isfinite(attn)))

    # Loose tolerances: bf16 MXU operands vs f32 reference.
    ref_out, ref_attn = attn_reference(params, x)
    assert float(jnp.max(jnp.abs(out - ref_out))) < 1e-1
    assert float(jnp.max(jnp.abs(attn - ref_attn))) < 5e-2
    # Exact normalization: attention rows sum to ~1.
    assert float(jnp.max(jnp.abs(jnp.sum(attn, axis=-1) - 1.0))) < 1e-5

    print("KERNEL_OK")
</pallas_src>

<mosaic_0001>
module attributes {stable_mosaic.version = 11 : i64} {
  func.func @_attn_kernel(%arg0: i32, %arg1: i32, %arg2: memref<1xf32, #tpu.memory_space<smem>>, %arg3: memref<1x64x128xf32, #tpu.memory_space<vmem>>, %arg4: memref<128x384xbf16, #tpu.memory_space<vmem>>, %arg5: memref<1x384xf32, #tpu.memory_space<vmem>>, %arg6: memref<1x64x128xf32, #tpu.memory_space<vmem>>, %arg7: memref<1x64x64xf32, #tpu.memory_space<vmem>>, %arg8: memref<64x384xbf16, #tpu.memory_space<vmem>>) attributes {dimension_semantics = [#tpu.dimension_semantics<parallel>, #tpu.dimension_semantics<arbitrary>], iteration_bounds = array<i64: 2, 1>, scalar_prefetch = 0 : i64, scratch_operands = 1 : i64, tpu.core_type = #tpu.core_type<tc>, window_params = [{transform_indices = @transform_0, window_bounds = array<i64: 1>}, {transform_indices = @transform_1, window_bounds = array<i64: 1, 64, 128>}, {pipeline_mode = #tpu.pipeline_mode<synchronous>, transform_indices = @transform_2, window_bounds = array<i64: 128, 384>}, {pipeline_mode = #tpu.pipeline_mode<synchronous>, transform_indices = @transform_3, window_bounds = array<i64: 1, 384>}, {transform_indices = @transform_4, window_bounds = array<i64: 1, 64, 128>}, {transform_indices = @transform_5, window_bounds = array<i64: 1, 64, 64>}]} {
    %c0_i32 = arith.constant 0 : i32
    %0 = arith.cmpi eq, %arg1, %c0_i32 : i32
    %1 = arith.extui %0 : i1 to i32
    %c0_i32_0 = arith.constant 0 : i32
    %2 = arith.cmpi ne, %1, %c0_i32_0 : i32
    scf.if %2 {
      %c0_15 = arith.constant 0 : index
      %c0_16 = arith.constant 0 : index
      %c0_17 = arith.constant 0 : index
      %34 = vector.load %arg3[%c0_15, %c0_16, %c0_17] : memref<1x64x128xf32, #tpu.memory_space<vmem>>, vector<1x64x128xf32>
      %35 = vector.shape_cast %34 : vector<1x64x128xf32> to vector<64x128xf32>
      %36 = arith.truncf %35 : vector<64x128xf32> to vector<64x128xbf16>
      %c0_18 = arith.constant 0 : index
      %c0_19 = arith.constant 0 : index
      %37 = vector.load %arg4[%c0_18, %c0_19] : memref<128x384xbf16, #tpu.memory_space<vmem>>, vector<128x384xbf16>
      %cst_20 = arith.constant dense<0.000000e+00> : vector<64x384xf32>
      %38 = tpu.matmul %36, %37, %cst_20 {dimension_numbers = #tpu.dot_dimension_numbers<[1], [0], [0], [1], [0, 0, 1, 1], [], []>} : vector<64x128xbf16>, vector<128x384xbf16>, vector<64x384xf32> -> vector<64x384xf32>
      %c0_21 = arith.constant 0 : index
      %c0_22 = arith.constant 0 : index
      %39 = vector.load %arg5[%c0_21, %c0_22] : memref<1x384xf32, #tpu.memory_space<vmem>>, vector<1x384xf32>
      %40 = vector.broadcast %39 : vector<1x384xf32> to vector<64x384xf32>
      %41 = arith.addf %38, %40 : vector<64x384xf32>
      %42 = arith.truncf %41 : vector<64x384xf32> to vector<64x384xbf16>
      %c0_23 = arith.constant 0 : index
      %c0_24 = arith.constant 0 : index
      %43 = vector.load %arg8[%c0_23, %c0_24] : memref<64x384xbf16, #tpu.memory_space<vmem>>, vector<64x384xbf16>
      tpu.vector_store %arg8[%c0_23, %c0_24], %42 {strides = array<i32>} : memref<64x384xbf16, #tpu.memory_space<vmem>>, vector<64x384xbf16>,
    } else {
    }
    %c64_i32 = arith.constant 64 : i32
    %3 = arith.muli %arg1, %c64_i32 : i32
    %4 = tpu.assume_multiple %3, 64 : i32
    %5 = arith.index_cast %4 : i32 to index
    %c0 = arith.constant 0 : index
    %6 = vector.load %arg8[%5, %c0] : memref<64x384xbf16, #tpu.memory_space<vmem>>, vector<64x128xbf16>
    %c0_1 = arith.constant 0 : index
    %c128 = arith.constant 128 : index
    %7 = vector.load %arg8[%c0_1, %c128] : memref<64x384xbf16, #tpu.memory_space<vmem>>, vector<64x128xbf16>
    %c0_2 = arith.constant 0 : index
    %c256 = arith.constant 256 : index
    %8 = vector.load %arg8[%c0_2, %c256] : memref<64x384xbf16, #tpu.memory_space<vmem>>, vector<64x128xbf16>
    %cst = arith.constant dense<0.000000e+00> : vector<64x64xf32>
    %9 = tpu.matmul %6, %7, %cst {dimension_numbers = #tpu.dot_dimension_numbers<[1], [1], [0], [0], [0, 0, 1, 0], [], []>} : vector<64x128xbf16>, vector<64x128xbf16>, vector<64x64xf32> -> vector<64x64xf32>
    %cst_3 = arith.constant dense<0xFF800000> : vector<64xf32>
    %10 = vector.multi_reduction <maximumf>, %9, %cst_3 [1] : vector<64x64xf32> to vector<64xf32>
    %11 = vector.shape_cast %10 : vector<64xf32> to vector<64x1xf32>
    %12 = vector.broadcast %11 : vector<64x1xf32> to vector<64x64xf32>
    %13 = arith.subf %9, %12 : vector<64x64xf32>
    %14 = math.exp %13 : vector<64x64xf32>
    %cst_4 = arith.constant dense<0.000000e+00> : vector<64xf32>
    %15 = vector.multi_reduction <add>, %14, %cst_4 [1] : vector<64x64xf32> to vector<64xf32>
    %16 = vector.shape_cast %15 : vector<64xf32> to vector<64x1xf32>
    %17 = vector.broadcast %16 : vector<64x1xf32> to vector<64x64xf32>
    %18 = arith.divf %14, %17 : vector<64x64xf32>
    %c0_5 = arith.constant 0 : index
    %c0_6 = arith.constant 0 : index
    %c0_7 = arith.constant 0 : index
    %19 = vector.load %arg7[%c0_5, %c0_6, %c0_7] : memref<1x64x64xf32, #tpu.memory_space<vmem>>, vector<1x64x64xf32>
    %20 = vector.shape_cast %19 : vector<1x64x64xf32> to vector<64x64xf32>
    %21 = vector.shape_cast %18 : vector<64x64xf32> to vector<1x64x64xf32>
    tpu.vector_store %arg7[%c0_5, %c0_6, %c0_7], %21 {strides = array<i32>} : memref<1x64x64xf32, #tpu.memory_space<vmem>>, vector<1x64x64xf32>,
    %22 = arith.truncf %18 : vector<64x64xf32> to vector<64x64xbf16>
    %cst_8 = arith.constant dense<0.000000e+00> : vector<64x128xf32>
    %23 = tpu.matmul %22, %8, %cst_8 {dimension_numbers = #tpu.dot_dimension_numbers<[1], [0], [0], [1], [0, 0, 1, 1], [], []>} : vector<64x64xbf16>, vector<64x128xbf16>, vector<64x128xf32> -> vector<64x128xf32>
    %c0_9 = arith.constant 0 : index
    %24 = arith.index_cast %4 : i32 to index
    %c0_10 = arith.constant 0 : index
    %25 = vector.load %arg3[%c0_9, %24, %c0_10] : memref<1x64x128xf32, #tpu.memory_space<vmem>>, vector<1x64x128xf32>
    %26 = vector.shape_cast %25 : vector<1x64x128xf32> to vector<64x128xf32>
    %c0_11 = arith.constant 0 : index
    %27 = memref.load %arg2[%c0_11] : memref<1xf32, #tpu.memory_space<smem>>
    %28 = vector.broadcast %27 : f32 to vector<64x128xf32>
    %29 = arith.mulf %28, %23 : vector<64x128xf32>
    %30 = arith.addf %29, %26 : vector<64x128xf32>
    %c0_12 = arith.constant 0 : index
    %c0_13 = arith.constant 0 : index
    %c0_14 = arith.constant 0 : index
    %31 = vector.load %arg6[%c0_12, %c0_13, %c0_14] : memref<1x64x128xf32, #tpu.memory_space<vmem>>, vector<1x64x128xf32>
    %32 = vector.shape_cast %31 : vector<1x64x128xf32> to vector<64x128xf32>
    %33 = vector.shape_cast %30 : vector<64x128xf32> to vector<1x64x128xf32>
    tpu.vector_store %arg6[%c0_12, %c0_13, %c0_14], %33 {strides = array<i32>} : memref<1x64x128xf32, #tpu.memory_space<vmem>>, vector<1x64x128xf32>,
    return
  }
  func.func @transform_0(%arg0: i32, %arg1: i32) -> i32 {
    %c0_i32 = arith.constant 0 : i32
    %c0_i32_0 = arith.constant 0 : i32
    return %c0_i32 : i32
  }
  func.func @transform_1(%arg0: i32, %arg1: i32) -> (i32, i32, i32) {
    %c0_i32 = arith.constant 0 : i32
    %c0_i32_0 = arith.constant 0 : i32
    %c0_i32_1 = arith.constant 0 : i32
    return %arg0, %c0_i32, %c0_i32_0 : i32, i32, i32
  }
  func.func @transform_2(%arg0: i32, %arg1: i32) -> (i32, i32) {
    %c0_i32 = arith.constant 0 : i32
    %c0_i32_0 = arith.constant 0 : i32
    %c0_i32_1 = arith.constant 0 : i32
    return %c0_i32, %c0_i32_0 : i32, i32
  }
  func.func @transform_3(%arg0: i32, %arg1: i32) -> (i32, i32) {
    %c0_i32 = arith.constant 0 : i32
    %c0_i32_0 = arith.constant 0 : i32
    %c0_i32_1 = arith.constant 0 : i32
    return %c0_i32, %c0_i32_0 : i32, i32
  }
  func.func @transform_4(%arg0: i32, %arg1: i32) -> (i32, i32, i32) {
    %c0_i32 = arith.constant 0 : i32
    %c0_i32_0 = arith.constant 0 : i32
    return %arg0, %arg1, %c0_i32 : i32, i32, i32
  }
  func.func @transform_5(%arg0: i32, %arg1: i32) -> (i32, i32, i32) {
    %c0_i32 = arith.constant 0 : i32
    %c0_i32_0 = arith.constant 0 : i32
    return %arg0, %arg1, %c0_i32 : i32, i32, i32
  }
}

</mosaic_0001>

<llo_original>
// kernel: attn_forward.1
$region0: #{attn_forward.1}
  #allocation0 [shape = 'u32[]', space=smem, size = 0x4, offset = 0x4, fixed_abs, tag = 'smem constant byte address 0x4 - core index']
  #allocation1 [shape = 'u32[72,128]{1,0:T(1,128)}', space=vmem, size = 0x9000, scoped, tag = 'internal scratch']
  #allocation2 [shape = 'bf16[64,384]{1,0:T(8,128)(2,1)}', space=vmem, size = 0xc000, scoped, tag = 'scratch operand']
  #allocation3 [shape = 'f32[1]{0:T(128)S(6)}', space=smem, size = 0x200, scoped, tag = 'scoped memory for attn_forward.1']
  %s0 = inlined_call_operand.<no memory space> [shape: f32[1], index: 0, kind: input, shape index: {}]
  %s1 = inlined_call_operand.vmem [shape: f32[2,64,128], index: 1, kind: input, shape index: {}]
  %s2 = inlined_call_operand.vmem [shape: bf16[128,384], index: 2, kind: input, shape index: {}]
  %s3 = inlined_call_operand.vmem [shape: f32[1,384], index: 3, kind: input, shape index: {}]
  %s4 = inlined_call_operand.hbm [shape: f32[2,64,128], index: 4, kind: output, shape index: {0}]
  %s5 = inlined_call_operand.hbm [shape: f32[2,64,64], index: 5, kind: output, shape index: {1}]
  %6 = xla_tuple %s4, %s5
  %s7 = sld [smem:[#allocation0]]
  $region61: #{attn_forward.1} parent=0
    _
  %s9 = ssub.s32 1, %s7
  %s10 = scalar_select 0, %s9, %s7
  %11 = sst [smem:[#allocation3]] %s0
  $region1: #{attn_forward.1} parent=0
    #allocation4 [shape = 'u8[65536]{0}', space=vmem, size = 0x10000, scoped, tag = 'output window, operand 0']
    #allocation5 [shape = 's32[2]{0}', space=sflag, size = 0x8, scoped, tag = 'scoped memory for attn_forward.1']
    #allocation6 [shape = 'u8[65536]{0}', space=vmem, size = 0x10000, scoped, tag = 'output window, operand 1']
    #allocation7 [shape = 's32[2]{0}', space=sflag, size = 0x8, scoped, tag = 'scoped memory for attn_forward.1']
    %12 = vsyncpa [#allocation5], 0
    %s13 = scalar_lea.sflag [#allocation5], 1
    %14 = vsyncpa %s13, 0
    %15 = vsyncpa [#allocation7], 0
    %s16 = scalar_lea.sflag [#allocation7], 1
    %17 = vsyncpa %s16, 0
    loop: start=0, step=1, limit=4
    $region2: #{attn_forward.1} parent=1 // loop_pre_header
      _
    $region3: #{attn_forward.1} parent=1 // loop_header
      %s19 = sphi 0, %s23
      %p20 = scmp.ge.s32.totalorder %s19, 4
      %s26 = sphi 0, %s38
      %s27 = sphi 0, %s34
      %s28 = sphi 0, %s26
      %s29 = sphi 0, %s27
      %s30 = sphi 0, %s28
      %s31 = sphi 0, %s29
      %s39 = sphi 0, %s39
      %s41 = sphi 0, %s39
      %s42 = sphi 0, %s41
      %s56 = sphi 0, %s42
      %s62 = sphi 0, %s64
      %s65 = sphi 0, %s62
      %s66 = sphi 0, %s65
      %s82 = sphi 0, %s66
      %s86 = sphi 0, %s86
      %s88 = sphi 0, %s86
      %s89 = sphi 0, %s88
      %s103 = sphi 0, %s89
      %s107 = sphi 0, %s107
      %s109 = sphi 0, %s107
      %s110 = sphi 0, %s109
      %s124 = sphi 0, %s110
      %s132 = sphi 0, %s134
      %s135 = sphi 0, %s132
      %s136 = sphi 0, %s135
      %s152 = sphi 0, %s136
      %s160 = sphi 0, %s162
      %s163 = sphi 0, %s160
      %s164 = sphi 0, %s163
      %s180 = sphi 0, %s164
    $region4: #{attn_forward.1} parent=1 // loop_header_branch
      %22 = sbr.rel (%p20) target = $region8
    $region5: #{attn_forward.1} parent=1 // loop_body
      %s24 = ssub.s32 %s19, 1
      %s25 = ssub.s32 %s19, 2
      %s32 = sadd.s32 1, %s27
      %p33 = scmp.ge.s32.totalorder %s32, 1
      %s34 = scalar_select %p33, 0, %s32
      %s35 = sadd.s32 1, %s26
      %s36 = scalar_select %p33, %s35, %s26
      %p37 = scmp.ge.s32.totalorder %s36, 2
      %s38 = scalar_select %p37, 0, %s36
      %s40 = sadd.s32 %s39, 1
      %p43 = scmp.eq.s32.totalorder %s19, 1
      %p44 = scmp.ne.s32.totalorder %s39, %s41
      %p45 = scmp.eq.s32.totalorder %s19, 0
      %p46 = por %p44, %p45
      %p47 = scmp.ne.s32.totalorder %s39, %s41
      %p48 = scmp.eq.s32.totalorder %s24, 1
      %p49 = por %p47, %p48
      %p50 = scmp.ne.s32.totalorder %s41, %s42
      %p51 = scmp.eq.s32.totalorder %s24, 0
      %p52 = por %p50, %p51
      %p53 = scmp.ne.s32.totalorder %s41, %s42
      %p54 = scmp.eq.s32.totalorder %s25, 1
      %p55 = por %p53, %p54
      %p57 = scmp.ne.s32.totalorder %s42, %s56
      %p58 = scmp.eq.s32.totalorder %s25, 0
      %p59 = por %p57, %p58
      %s60 = ssub.s32 %s26, %s38
      %p61 = scmp.eq.s32.totalorder %s60, 0
      %s63 = sadd.s32 %s62, 1
      %s64 = scalar_select %p61, %s62, %s63
      %p67 = pneg %p61
      %p68 = scmp.eq.s32.totalorder %s19, 1
      %p69 = por %p67, %p68
      %p70 = scmp.ne.s32.totalorder %s62, %s65
      %p71 = scmp.eq.s32.totalorder %s19, 0
      %p72 = por %p70, %p71
      %p73 = scmp.ne.s32.totalorder %s62, %s65
      %p74 = scmp.eq.s32.totalorder %s24, 1
      %p75 = por %p73, %p74
      %p76 = scmp.ne.s32.totalorder %s65, %s66
      %p77 = scmp.eq.s32.totalorder %s24, 0
      %p78 = por %p76, %p77
      %p79 = scmp.ne.s32.totalorder %s65, %s66
      %p80 = scmp.eq.s32.totalorder %s25, 1
      %p81 = por %p79, %p80
      %p83 = scmp.ne.s32.totalorder %s66, %s82
      %p84 = scmp.eq.s32.totalorder %s25, 0
      %p85 = por %p83, %p84
      %s87 = sadd.s32 %s86, 1
      %p90 = scmp.eq.s32.totalorder %s19, 1
      %p91 = scmp.ne.s32.totalorder %s86, %s88
      %p92 = scmp.eq.s32.totalorder %s19, 0
      %p93 = por %p91, %p92
      %p94 = scmp.ne.s32.totalorder %s86, %s88
      %p95 = scmp.eq.s32.totalorder %s24, 1
      %p96 = por %p94, %p95
      %p97 = scmp.ne.s32.totalorder %s88, %s89
      %p98 = scmp.eq.s32.totalorder %s24, 0
      %p99 = por %p97, %p98
      %p100 = scmp.ne.s32.totalorder %s88, %s89
      %p101 = scmp.eq.s32.totalorder %s25, 1
      %p102 = por %p100, %p101
      %p104 = scmp.ne.s32.totalorder %s89, %s103
      %p105 = scmp.eq.s32.totalorder %s25, 0
      %p106 = por %p104, %p105
      %s108 = sadd.s32 %s107, 1
      %p111 = scmp.eq.s32.totalorder %s19, 1
      %p112 = scmp.ne.s32.totalorder %s107, %s109
      %p113 = scmp.eq.s32.totalorder %s19, 0
      %p114 = por %p112, %p113
      %p115 = scmp.ne.s32.totalorder %s107, %s109
      %p116 = scmp.eq.s32.totalorder %s24, 1
      %p117 = por %p115, %p116
      %p118 = scmp.ne.s32.totalorder %s109, %s110
      %p119 = scmp.eq.s32.totalorder %s24, 0
      %p120 = por %p118, %p119
      %p121 = scmp.ne.s32.totalorder %s109, %s110
      %p122 = scmp.eq.s32.totalorder %s25, 1
      %p123 = por %p121, %p122
      %p125 = scmp.ne.s32.totalorder %s110, %s124
      %p126 = scmp.eq.s32.totalorder %s25, 0
      %p127 = por %p125, %p126
      %s128 = ssub.s32 %s26, %s38
      %s129 = ssub.s32 %s27, %s34
      %s130 = sor.u32 %s128, %s129
      %p131 = scmp.eq.s32.totalorder %s130, 0
      %s133 = sadd.s32 %s132, 1
      %s134 = scalar_select %p131, %s132, %s133
      %p137 = pneg %p131
      %p138 = scmp.eq.s32.totalorder %s19, 1
      %p139 = por %p137, %p138
      %p140 = scmp.ne.s32.totalorder %s132, %s135
      %p141 = scmp.eq.s32.totalorder %s19, 0
      %p142 = por %p140, %p141
      %p143 = scmp.ne.s32.totalorder %s132, %s135
      %p144 = scmp.eq.s32.totalorder %s24, 1
      %p145 = por %p143, %p144
      %p146 = scmp.ne.s32.totalorder %s135, %s136
      %p147 = scmp.eq.s32.totalorder %s24, 0
      %p148 = por %p146, %p147
      %p149 = scmp.ne.s32.totalorder %s135, %s136
      %p150 = scmp.eq.s32.totalorder %s25, 1
      %p151 = por %p149, %p150
      %p153 = scmp.ne.s32.totalorder %s136, %s152
      %p154 = scmp.eq.s32.totalorder %s25, 0
      %p155 = por %p153, %p154
      %s156 = ssub.s32 %s26, %s38
      %s157 = ssub.s32 %s27, %s34
      %s158 = sor.u32 %s156, %s157
      %p159 = scmp.eq.s32.totalorder %s158, 0
      %s161 = sadd.s32 %s160, 1
      %s162 = scalar_select %p159, %s160, %s161
      %p165 = pneg %p159
      %p166 = scmp.eq.s32.totalorder %s19, 1
      %p167 = por %p165, %p166
      %p168 = scmp.ne.s32.totalorder %s160, %s163
      %p169 = scmp.eq.s32.totalorder %s19, 0
      %p170 = por %p168, %p169
      %p171 = scmp.ne.s32.totalorder %s160, %s163
      %p172 = scmp.eq.s32.totalorder %s24, 1
      %p173 = por %p171, %p172
      %p174 = scmp.ne.s32.totalorder %s163, %s164
      %p175 = scmp.eq.s32.totalorder %s24, 0
      %p176 = por %p174, %p175
      %p177 = scmp.ne.s32.totalorder %s163, %s164
      %p178 = scmp.eq.s32.totalorder %s25, 1
      %p179 = por %p177, %p178
      %p181 = scmp.ne.s32.totalorder %s164, %s180
      %p182 = scmp.eq.s32.totalorder %s25, 0
      %p183 = por %p181, %p182
      %p184 = scmp.le.s32.totalorder 1, %s19
      %p185 = scmp.lt.s32.totalorder %s19, 3
      %p186 = pnand %p184, %p185
      %p187 = pneg %p186
      // Predicated region
      $region9: #{attn_forward.1} parent=5 // pred_check
        _
      $region10: #{attn_forward.1} parent=5 // pred_check_branch
        %189 = sbr.rel (%p186) target = $region12
      $region11: #{attn_forward.1} parent=5 // pred_region
        %s190 = ssub.s32 %s19, 1
        // Predicated region
        $region13: #{attn_forward.1} parent=11 // pred_check
          %p191 = pneg %p52
        $region14: #{attn_forward.1} parent=11 // pred_check_branch
          %193 = sbr.rel (%p191) target = $region16
        $region15: #{attn_forward.1} parent=11 // pred_region
          _
        $region16: #{attn_forward.1} parent=11 // pred_fallthru
          _
        // Predicated region
        $region17: #{attn_forward.1} parent=11 // pred_check
          %p194 = pneg %p99
        $region18: #{attn_forward.1} parent=11 // pred_check_branch
          %196 = sbr.rel (%p194) target = $region20
        $region19: #{attn_forward.1} parent=11 // pred_region
          _
        $region20: #{attn_forward.1} parent=11 // pred_fallthru
          _
        // Predicated region
        $region21: #{attn_forward.1} parent=11 // pred_check
          %p197 = pneg %p120
        $region22: #{attn_forward.1} parent=11 // pred_check_branch
          %199 = sbr.rel (%p197) target = $region24
        $region23: #{attn_forward.1} parent=11 // pred_region
          _
        $region24: #{attn_forward.1} parent=11 // pred_fallthru
          _
      $region12: #{attn_forward.1} parent=5 // pred_fallthru
        _
      %p200 = scmp.lt.s32.totalorder %s19, 2
      // Predicated region
      $region25: #{attn_forward.1} parent=5 // pred_check
        %p201 = pneg %p200
      $region26: #{attn_forward.1} parent=5 // pred_check_branch
        %203 = sbr.rel (%p201) target = $region28
      $region27: #{attn_forward.1} parent=5 // pred_region
        // Predicated region
        $region29: #{attn_forward.1} parent=27 // pred_check
          %p204 = pneg %p72
        $region30: #{attn_forward.1} parent=27 // pred_check_branch
          %206 = sbr.rel (%p204) target = $region32
        $region31: #{attn_forward.1} parent=27 // pred_region
          %p207 = scmp.lt.s32.totalorder %s26, 1
          %s208 = scalar_select %p207, %s26, 1
          %s209 = smul.addr %s208, 8
          %s210 = smul.addr %s209, 8
          %s211 = scalar_lea.vmem %s1, %s210
        $region32: #{attn_forward.1} parent=27 // pred_fallthru
          _
      $region28: #{attn_forward.1} parent=5 // pred_fallthru
        _
      %p212 = scmp.le.s32.totalorder 1, %s19
      %p213 = scmp.lt.s32.totalorder %s19, 3
      %p214 = pnand %p212, %p213
      %p215 = pneg %p214
      // Predicated region
      $region33: #{attn_forward.1} parent=5 // pred_check
        _
      $region34: #{attn_forward.1} parent=5 // pred_check_branch
        %217 = sbr.rel (%p214) target = $region36
      $region35: #{attn_forward.1} parent=5 // pred_region
        %s218 = ssub.s32 %s19, 1
        %p219 = pneg %p52
        %p220 = pneg %p49
        %p221 = scmp.lt.s32.totalorder %s28, 1
        %s222 = scalar_select %p221, %s28, 1
        %s223 = smul.addr %s222, 8
        %s224 = smul.addr %s223, 8
        %s225 = scalar_lea.vmem %s1, %s224
        %p226 = pneg %p78
        %p227 = pneg %p75
        %p228 = pneg %p99
        %p229 = pneg %p96
        %p230 = pneg %p120
        %p231 = pneg %p117
        %p232 = pneg %p148
        %p233 = pneg %p145
        %s234 = sand.u32 %s135, 1
        %s235 = scalar_lea.sflag [#allocation5], %s234
        %s236 = sand.u32 %s135, 1
        %s237 = smul.addr %s236, 64
        %s238 = scalar_lea.vmem [#allocation4], %s237
        %p239 = pneg %p176
        %p240 = pneg %p173
        %s241 = sand.u32 %s163, 1
        %s242 = scalar_lea.sflag [#allocation7], %s241
        %s243 = sand.u32 %s163, 1
        %s244 = smul.addr %s243, 64
        %s245 = scalar_lea.vmem [#allocation6], %s244
        %p246 = scmp.lt.s32.totalorder %s28, 1
        %s247 = scalar_select %p246, %s28, 1
        %s248 = smul.addr %s247, 8
        %s249 = smul.addr %s248, 8
        %s250 = scalar_lea.vmem %s1, %s249
        %s251 = smul.u32 8, %s29
        %s252 = smul.u32 8, %s29
        %p254 = scmp.eq.s32.totalorder %s29, 0
        // Predicated region
        $region37: #{attn_forward.1} parent=35 // pred_check
          %p255 = pneg %p254
        $region38: #{attn_forward.1} parent=35 // pred_check_branch
          %257 = sbr.rel (%p255) target = $region40
        $region39: #{attn_forward.1} parent=35 // pred_region
          %v258 = vld [vmem:[%s250] sm:$0xff]
          %v259 = vld [vmem:[%s250 + $0x8] sm:$0xff]
          %v260 = vld [vmem:[%s250 + $0x10] sm:$0xff]
          %v261 = vld [vmem:[%s250 + $0x18] sm:$0xff]
          %v262 = vld [vmem:[%s250 + $0x20] sm:$0xff]
          %v263 = vld [vmem:[%s250 + $0x28] sm:$0xff]
          %v264 = vld [vmem:[%s250 + $0x30] sm:$0xff]
          %v265 = vld [vmem:[%s250 + $0x38] sm:$0xff]
          %v266 = vpack.c.bf16 %v259, %v258
          %v267 = vpack.c.bf16 %v261, %v260
          %v268 = vpack.c.bf16 %v263, %v262
          %v269 = vpack.c.bf16 %v265, %v264
          %v270 = vld [vmem:[%s2] sm:$0xff]
          %v271 = vld [vmem:[%s2 + $0x8] sm:$0xf]
          %v272 = vld [vmem:[%s2 + $0xc] sm:$0xff]
          %v273 = vld [vmem:[%s2 + $0x14] sm:$0xf]
          %v274 = vld [vmem:[%s2 + $0x18] sm:$0xff]
          %v275 = vld [vmem:[%s2 + $0x20] sm:$0xf]
          %v276 = vld [vmem:[%s2 + $0x24] sm:$0xff]
          %v277 = vld [vmem:[%s2 + $0x2c] sm:$0xf]
          %v278 = vld [vmem:[%s2 + $0x30] sm:$0xff]
          %v279 = vld [vmem:[%s2 + $0x38] sm:$0xf]
          %v280 = vld [vmem:[%s2 + $0x3c] sm:$0xff]
          %v281 = vld [vmem:[%s2 + $0x44] sm:$0xf]
          %v282 = vld [vmem:[%s2 + $0x48] sm:$0xff]
          %v283 = vld [vmem:[%s2 + $0x50] sm:$0xf]
          %v284 = vld [vmem:[%s2 + $0x54] sm:$0xff]
          %v285 = vld [vmem:[%s2 + $0x5c] sm:$0xf]
          %v286 = vld [vmem:[%s2 + $0x60] sm:$0xff]
          %v287 = vld [vmem:[%s2 + $0x68] sm:$0xf]
          %v288 = vld [vmem:[%s2 + $0x6c] sm:$0xff]
          %v289 = vld [vmem:[%s2 + $0x74] sm:$0xf]
          %v290 = vld [vmem:[%s2 + $0x78] sm:$0xff]
          %v291 = vld [vmem:[%s2 + $0x80] sm:$0xf]
          %v292 = vld [vmem:[%s2 + $0x84] sm:$0xff]
          %v293 = vld [vmem:[%s2 + $0x8c] sm:$0xf]
          %v294 = vld [vmem:[%s2 + $0x90] sm:$0xff]
          %v295 = vld [vmem:[%s2 + $0x98] sm:$0xf]
          %v296 = vld [vmem:[%s2 + $0x9c] sm:$0xff]
          %v297 = vld [vmem:[%s2 + $0xa4] sm:$0xf]
          %v298 = vld [vmem:[%s2 + $0xa8] sm:$0xff]
          %v299 = vld [vmem:[%s2 + $0xb0] sm:$0xf]
          %v300 = vld [vmem:[%s2 + $0xb4] sm:$0xff]
          %v301 = vld [vmem:[%s2 + $0xbc] sm:$0xf]
          %v302 = vld [vmem:[%s3] sm:$0x7]
          %v304 = vperm.slane %v302, 0
          %v305 = vperm.slane %v302, 1
          %v306 = vperm.slane %v302, 2
          %v342 = vunpack.c.l.b16 %v270
          %v343 = vunpack.c.h.b16 %v270
          %v344 = vunpack.c.l.b16 %v271
          %v345 = vunpack.c.l.b16 %v272
          %v346 = vunpack.c.h.b16 %v272
          %v347 = vunpack.c.l.b16 %v273
          %v348 = vunpack.c.l.b16 %v274
          %v349 = vunpack.c.h.b16 %v274
          %v350 = vunpack.c.l.b16 %v275
          %v351 = vunpack.c.l.b16 %v276
          %v352 = vunpack.c.h.b16 %v276
          %v353 = vunpack.c.l.b16 %v277
          %v354 = vunpack.c.l.b16 %v278
          %v355 = vunpack.c.h.b16 %v278
          %v356 = vunpack.c.l.b16 %v279
          %v357 = vunpack.c.l.b16 %v280
          %v358 = vunpack.c.h.b16 %v280
          %v359 = vunpack.c.l.b16 %v281
          %v360 = vunpack.c.l.b16 %v282
          %v361 = vunpack.c.h.b16 %v282
          %v362 = vunpack.c.l.b16 %v283
          %v363 = vunpack.c.l.b16 %v284
          %v364 = vunpack.c.h.b16 %v284
          %v365 = vunpack.c.l.b16 %v285
          %v366 = vunpack.c.l.b16 %v286
          %v367 = vunpack.c.h.b16 %v286
          %v368 = vunpack.c.l.b16 %v287
          %v369 = vunpack.c.l.b16 %v288
          %v370 = vunpack.c.h.b16 %v288
          %v371 = vunpack.c.l.b16 %v289
          %v372 = vunpack.c.l.b16 %v290
          %v373 = vunpack.c.h.b16 %v290
          %v374 = vunpack.c.l.b16 %v291
          %v375 = vunpack.c.l.b16 %v292
          %v376 = vunpack.c.h.b16 %v292
          %v377 = vunpack.c.l.b16 %v293
          %v378 = vunpack.c.l.b16 %v294
          %v379 = vunpack.c.h.b16 %v294
          %v380 = vunpack.c.l.b16 %v295
          %v381 = vunpack.c.l.b16 %v296
          %v382 = vunpack.c.h.b16 %v296
          %v383 = vunpack.c.l.b16 %v297
          %v384 = vunpack.c.l.b16 %v298
          %v385 = vunpack.c.h.b16 %v298
          %v386 = vunpack.c.l.b16 %v299
          %v387 = vunpack.c.l.b16 %v300
          %v388 = vunpack.c.h.b16 %v300
          %v389 = vunpack.c.l.b16 %v301
          %v390 = vpack.c.b16 %v345, %v342
          %v391 = vpack.c.b16 %v346, %v343
          %v392 = vpack.c.b16 %v347, %v344
          %v393 = vpack.c.b16 %v351, %v348
          %v394 = vpack.c.b16 %v352, %v349
          %v395 = vpack.c.b16 %v353, %v350
          %v396 = vpack.c.b16 %v357, %v354
          %v397 = vpack.c.b16 %v358, %v355
          %v398 = vpack.c.b16 %v359, %v356
          %v399 = vpack.c.b16 %v363, %v360
          %v400 = vpack.c.b16 %v364, %v361
          %v401 = vpack.c.b16 %v365, %v362
          %v402 = vpack.c.b16 %v369, %v366
          %v403 = vpack.c.b16 %v370, %v367
          %v404 = vpack.c.b16 %v371, %v368
          %v405 = vpack.c.b16 %v375, %v372
          %v406 = vpack.c.b16 %v376, %v373
          %v407 = vpack.c.b16 %v377, %v374
          %v408 = vpack.c.b16 %v381, %v378
          %v409 = vpack.c.b16 %v382, %v379
          %v410 = vpack.c.b16 %v383, %v380
          %v411 = vpack.c.b16 %v387, %v384
          %v412 = vpack.c.b16 %v388, %v385
          %v413 = vpack.c.b16 %v389, %v386
          %438 = vmatpush.bf16.msra.mxu0 %v411
          %439 = vmatpush.bf16.msra.mxu0 %v408
          %440 = vmatpush.bf16.msra.mxu0 %v405
          %441 = vmatpush.bf16.msra.mxu0 %v402
          %442 = vmatpush.bf16.msra.mxu0 %v399
          %443 = vmatpush.bf16.msra.mxu0 %v396
          %444 = vmatpush.bf16.msra.mxu0 %v393
          %445 = vmatpush.bf16.msra.mxu0 %v390
          %446 = vmatmul.bf16.gmra.mxu0 %v266
          %v447 = vpop.f32.mrf.mxu0
          %v448 = vadd.f32 %v304, %v447
          %v449 = vpop.f32.mrf.mxu0
          %v450 = vadd.f32 %v304, %v449
          %451 = vmatmul.bf16.gmra.mxu0 %v267
          %v452 = vpop.f32.mrf.mxu0
          %v453 = vadd.f32 %v304, %v452
          %v454 = vpop.f32.mrf.mxu0
          %v455 = vadd.f32 %v304, %v454
          %456 = vmatmul.bf16.gmra.mxu0 %v268
          %v457 = vpop.f32.mrf.mxu0
          %v458 = vadd.f32 %v304, %v457
          %v459 = vpop.f32.mrf.mxu0
          %v460 = vadd.f32 %v304, %v459
          %461 = vmatmul.bf16.gmra.mxu0 %v269
          %v462 = vpop.f32.mrf.mxu0
          %v463 = vadd.f32 %v304, %v462
          %v464 = vpop.f32.mrf.mxu0
          %v465 = vadd.f32 %v304, %v464
          %466 = vdwg.mxu0
          %467 = vmatpush.bf16.msra.mxu0 %v412
          %468 = vmatpush.bf16.msra.mxu0 %v409
          %469 = vmatpush.bf16.msra.mxu0 %v406
          %470 = vmatpush.bf16.msra.mxu0 %v403
          %471 = vmatpush.bf16.msra.mxu0 %v400
          %472 = vmatpush.bf16.msra.mxu0 %v397
          %473 = vmatpush.bf16.msra.mxu0 %v394
          %474 = vmatpush.bf16.msra.mxu0 %v391
          %475 = vmatmul.bf16.gmra.mxu0 %v266
          %v476 = vpop.f32.mrf.mxu0
          %v477 = vadd.f32 %v305, %v476
          %v478 = vpop.f32.mrf.mxu0
          %v479 = vadd.f32 %v305, %v478
          %480 = vmatmul.bf16.gmra.mxu0 %v267
          %v481 = vpop.f32.mrf.mxu0
          %v482 = vadd.f32 %v305, %v481
          %v483 = vpop.f32.mrf.mxu0
          %v484 = vadd.f32 %v305, %v483
          %485 = vmatmul.bf16.gmra.mxu0 %v268
          %v486 = vpop.f32.mrf.mxu0
          %v487 = vadd.f32 %v305, %v486
          %v488 = vpop.f32.mrf.mxu0
          %v489 = vadd.f32 %v305, %v488
          %490 = vmatmul.bf16.gmra.mxu0 %v269
          %v491 = vpop.f32.mrf.mxu0
          %v492 = vadd.f32 %v305, %v491
          %v493 = vpop.f32.mrf.mxu0
          %v494 = vadd.f32 %v305, %v493
          %495 = vdwg.mxu0
          %496 = vmatpush.bf16.msra.mxu0 %v413
          %497 = vmatpush.bf16.msra.mxu0 %v410
          %498 = vmatpush.bf16.msra.mxu0 %v407
          %499 = vmatpush.bf16.msra.mxu0 %v404
          %500 = vmatpush.bf16.msra.mxu0 %v401
          %501 = vmatpush.bf16.msra.mxu0 %v398
          %502 = vmatpush.bf16.msra.mxu0 %v395
          %503 = vmatpush.bf16.msra.mxu0 %v392
          %504 = vmatmul.bf16.gmra.mxu0 %v266
          %v505 = vpop.f32.mrf.mxu0
          %v506 = vadd.f32 %v306, %v505
          %v507 = vpop.f32.mrf.mxu0
          %v508 = vadd.f32 %v306, %v507
          %509 = vmatmul.bf16.gmra.mxu0 %v267
          %v510 = vpop.f32.mrf.mxu0
          %v511 = vadd.f32 %v306, %v510
          %v512 = vpop.f32.mrf.mxu0
          %v513 = vadd.f32 %v306, %v512
          %514 = vmatmul.bf16.gmra.mxu0 %v268
          %v515 = vpop.f32.mrf.mxu0
          %v516 = vadd.f32 %v306, %v515
          %v517 = vpop.f32.mrf.mxu0
          %v518 = vadd.f32 %v306, %v517
          %519 = vmatmul.bf16.gmra.mxu0 %v269
          %v520 = vpop.f32.mrf.mxu0
          %v521 = vadd.f32 %v306, %v520
          %v522 = vpop.f32.mrf.mxu0
          %v523 = vadd.f32 %v306, %v522
          %524 = vdwg.mxu0
          %v525 = vpack.c.bf16 %v477, %v448
          %v526 = vpack.c.bf16 %v506, %v506
          %v527 = vpack.c.bf16 %v479, %v450
          %v528 = vpack.c.bf16 %v508, %v508
          %v529 = vpack.c.bf16 %v482, %v453
          %v530 = vpack.c.bf16 %v511, %v511
          %v531 = vpack.c.bf16 %v484, %v455
          %v532 = vpack.c.bf16 %v513, %v513
          %v533 = vpack.c.bf16 %v487, %v458
          %v534 = vpack.c.bf16 %v516, %v516
          %v535 = vpack.c.bf16 %v489, %v460
          %v536 = vpack.c.bf16 %v518, %v518
          %v537 = vpack.c.bf16 %v492, %v463
          %v538 = vpack.c.bf16 %v521, %v521
          %v539 = vpack.c.bf16 %v494, %v465
          %v540 = vpack.c.bf16 %v523, %v523
          %541 = vst [vmem:[#allocation2] sm:$0xff] %v525
          %542 = vst [vmem:[#allocation2 + $0x8] sm:$0xf] %v526
          %543 = vst [vmem:[#allocation2 + $0xc] sm:$0xff] %v527
          %544 = vst [vmem:[#allocation2 + $0x14] sm:$0xf] %v528
          %545 = vst [vmem:[#allocation2 + $0x18] sm:$0xff] %v529
          %546 = vst [vmem:[#allocation2 + $0x20] sm:$0xf] %v530
          %547 = vst [vmem:[#allocation2 + $0x24] sm:$0xff] %v531
          %548 = vst [vmem:[#allocation2 + $0x2c] sm:$0xf] %v532
          %549 = vst [vmem:[#allocation2 + $0x30] sm:$0xff] %v533
          %550 = vst [vmem:[#allocation2 + $0x38] sm:$0xf] %v534
          %551 = vst [vmem:[#allocation2 + $0x3c] sm:$0xff] %v535
          %552 = vst [vmem:[#allocation2 + $0x44] sm:$0xf] %v536
          %553 = vst [vmem:[#allocation2 + $0x48] sm:$0xff] %v537
          %554 = vst [vmem:[#allocation2 + $0x50] sm:$0xf] %v538
          %555 = vst [vmem:[#allocation2 + $0x54] sm:$0xff] %v539
          %556 = vst [vmem:[#allocation2 + $0x5c] sm:$0xf] %v540
        $region40: #{attn_forward.1} parent=35 // pred_fallthru
          _
        %s557 = smul.u32 %s29, 64
        %s558 = sshra.s32 %s557, 3
        %s559 = sand.u32 %s557, 7
        %s560 = smul.u32 %s558, 3
        %s561 = smul.addr %s560, 4
        %s562 = scalar_lea.vmem [#allocation2], %s561
        %v563 = vld [vmem:[%s562] sm:$0xf]
        %v564 = vld [vmem:[%s562 + $0xc] sm:$0xf]
        %v565 = vld [vmem:[%s562 + $0x18] sm:$0xf]
        %v566 = vld [vmem:[%s562 + $0x24] sm:$0xf]
        %v567 = vld [vmem:[%s562 + $0x30] sm:$0xf]
        %v568 = vld [vmem:[%s562 + $0x3c] sm:$0xf]
        %v569 = vld [vmem:[%s562 + $0x48] sm:$0xf]
        %v570 = vld [vmem:[%s562 + $0x54] sm:$0xf]
        %v571 = vld [vmem:[#allocation2 + $0x4] sm:$0xf]
        %v572 = vld [vmem:[#allocation2 + $0x10] sm:$0xf]
        %v573 = vld [vmem:[#allocation2 + $0x1c] sm:$0xf]
        %v574 = vld [vmem:[#allocation2 + $0x28] sm:$0xf]
        %v575 = vld [vmem:[#allocation2 + $0x34] sm:$0xf]
        %v576 = vld [vmem:[#allocation2 + $0x40] sm:$0xf]
        %v577 = vld [vmem:[#allocation2 + $0x4c] sm:$0xf]
        %v578 = vld [vmem:[#allocation2 + $0x58] sm:$0xf]
        %v579 = vld [vmem:[#allocation2 + $0x8] sm:$0xf]
        %v580 = vld [vmem:[#allocation2 + $0x14] sm:$0xf]
        %v581 = vld [vmem:[#allocation2 + $0x20] sm:$0xf]
        %v582 = vld [vmem:[#allocation2 + $0x2c] sm:$0xf]
        %v583 = vld [vmem:[#allocation2 + $0x38] sm:$0xf]
        %v584 = vld [vmem:[#allocation2 + $0x44] sm:$0xf]
        %v585 = vld [vmem:[#allocation2 + $0x50] sm:$0xf]
        %v586 = vld [vmem:[#allocation2 + $0x5c] sm:$0xf]
        %v595 = vunpack.c.l.b16 %v563
        %v596 = vunpack.c.l.b16 %v564
        %v597 = vunpack.c.l.b16 %v565
        %v598 = vunpack.c.l.b16 %v566
        %v599 = vunpack.c.l.b16 %v567
        %v600 = vunpack.c.l.b16 %v568
        %v601 = vunpack.c.l.b16 %v569
        %v602 = vunpack.c.l.b16 %v570
        %v603 = vpack.c.b16 %v596, %v595
        %v604 = vpack.c.b16 %v598, %v597
        %v605 = vpack.c.b16 %v600, %v599
        %v606 = vpack.c.b16 %v602, %v601
        %v619 = vunpack.c.l.b16 %v571
        %v620 = vunpack.c.l.b16 %v572
        %v621 = vunpack.c.l.b16 %v573
        %v622 = vunpack.c.l.b16 %v574
        %v623 = vunpack.c.l.b16 %v575
        %v624 = vunpack.c.l.b16 %v576
        %v625 = vunpack.c.l.b16 %v577
        %v626 = vunpack.c.l.b16 %v578
        %v627 = vpack.c.b16 %v620, %v619
        %v628 = vpack.c.b16 %v622, %v621
        %v629 = vpack.c.b16 %v624, %v623
        %v630 = vpack.c.b16 %v626, %v625
        %635 = vmatpush.bf16.xpose.msra.mxu0 0
        %636 = vmatpush.bf16.xpose.msra.mxu0 0
        %637 = vmatpush.bf16.xpose.msra.mxu0 0
        %638 = vmatpush.bf16.xpose.msra.mxu0 0
        %639 = vmatpush.bf16.xpose.msra.mxu0 %v630
        %640 = vmatpush.bf16.xpose.msra.mxu0 %v629
        %641 = vmatpush.bf16.xpose.msra.mxu0 %v628
        %642 = vmatpush.bf16.xpose.msra.mxu0 %v627
        %643 = vmatmul.bf16.gmra.mxu0 %v603
        %v644 = vpop.f32.mrf.mxu0
        %v645 = vadd.f32 0.0, %v644
        %v646 = vpop.f32.mrf.mxu0
        %v647 = vadd.f32 0.0, %v646
        %648 = vmatmul.bf16.gmra.mxu0 %v604
        %v649 = vpop.f32.mrf.mxu0
        %v650 = vadd.f32 0.0, %v649
        %v651 = vpop.f32.mrf.mxu0
        %v652 = vadd.f32 0.0, %v651
        %653 = vmatmul.bf16.gmra.mxu0 %v605
        %v654 = vpop.f32.mrf.mxu0
        %v655 = vadd.f32 0.0, %v654
        %v656 = vpop.f32.mrf.mxu0
        %v657 = vadd.f32 0.0, %v656
        %658 = vmatmul.bf16.gmra.mxu0 %v606
        %v659 = vpop.f32.mrf.mxu0
        %v660 = vadd.f32 0.0, %v659
        %v661 = vpop.f32.mrf.mxu0
        %v662 = vadd.f32 0.0, %v661
        %663 = vdwg.mxu0
        %vm664 = vcmask 523264
        %v665 = vsel %vm664, %v645, -inf
        %666 = vmax.xlane.f32.xlu0 %v665
        %v667 = vpop.xlane.xlu0 %666
        %v668 = vsel %vm664, %v647, -inf
        %669 = vmax.xlane.f32.xlu0 %v668
        %v670 = vpop.xlane.xlu0 %669
        %v671 = vsel %vm664, %v650, -inf
        %672 = vmax.xlane.f32.xlu0 %v671
        %v673 = vpop.xlane.xlu0 %672
        %v674 = vsel %vm664, %v652, -inf
        %675 = vmax.xlane.f32.xlu0 %v674
        %v676 = vpop.xlane.xlu0 %675
        %v677 = vsel %vm664, %v655, -inf
        %678 = vmax.xlane.f32.xlu0 %v677
        %v679 = vpop.xlane.xlu0 %678
        %v680 = vsel %vm664, %v657, -inf
        %681 = vmax.xlane.f32.xlu0 %v680
        %v682 = vpop.xlane.xlu0 %681
        %v683 = vsel %vm664, %v660, -inf
        %684 = vmax.xlane.f32.xlu0 %v683
        %v685 = vpop.xlane.xlu0 %684
        %v686 = vsel %vm664, %v662, -inf
        %687 = vmax.xlane.f32.xlu0 %v686
        %v688 = vpop.xlane.xlu0 %687
        %v689 = vsub.f32 %v645, %v667
        %v690 = vsub.f32 %v647, %v670
        %v691 = vsub.f32 %v650, %v673
        %v692 = vsub.f32 %v652, %v676
        %v693 = vsub.f32 %v655, %v679
        %v694 = vsub.f32 %v657, %v682
        %v695 = vsub.f32 %v660, %v685
        %v696 = vsub.f32 %v662, %v688
        %v697 = vmul.f32 %v689, 1.442695
        %v698 = vpow.pop %v697
        %v699 = vmul.f32 %v690, 1.442695
        %v700 = vpow.pop %v699
        %v701 = vmul.f32 %v691, 1.442695
        %v702 = vpow.pop %v701
        %v703 = vmul.f32 %v692, 1.442695
        %v704 = vpow.pop %v703
        %v705 = vmul.f32 %v693, 1.442695
        %v706 = vpow.pop %v705
        %v707 = vmul.f32 %v694, 1.442695
        %v708 = vpow.pop %v707
        %v709 = vmul.f32 %v695, 1.442695
        %v710 = vpow.pop %v709
        %v711 = vmul.f32 %v696, 1.442695
        %v712 = vpow.pop %v711
        %v713 = vsel %vm664, %v698, 0.0
        %714 = vadd.xlane.f32.xlu0 %v713
        %v715 = vpop.xlane.xlu0 %714
        %v716 = vsel %vm664, %v700, 0.0
        %717 = vadd.xlane.f32.xlu0 %v716
        %v718 = vpop.xlane.xlu0 %717
        %v719 = vsel %vm664, %v702, 0.0
        %720 = vadd.xlane.f32.xlu0 %v719
        %v721 = vpop.xlane.xlu0 %720
        %v722 = vsel %vm664, %v704, 0.0
        %723 = vadd.xlane.f32.xlu0 %v722
        %v724 = vpop.xlane.xlu0 %723
        %v725 = vsel %vm664, %v706, 0.0
        %726 = vadd.xlane.f32.xlu0 %v725
        %v727 = vpop.xlane.xlu0 %726
        %v728 = vsel %vm664, %v708, 0.0
        %729 = vadd.xlane.f32.xlu0 %v728
        %v730 = vpop.xlane.xlu0 %729
        %v731 = vsel %vm664, %v710, 0.0
        %732 = vadd.xlane.f32.xlu0 %v731
        %v733 = vpop.xlane.xlu0 %732
        %v734 = vsel %vm664, %v712, 0.0
        %735 = vadd.xlane.f32.xlu0 %v734
        %v736 = vpop.xlane.xlu0 %735
        %v737 = vrcp.pop %v715
        %v738 = vmul.f32 %v715, %v737
        %v739 = vsub.f32 1.0, %v738
        %v740 = vmul.f32 %v737, %v739
        %v741 = vadd.f32 %v737, %v740
        %vm742 = vweird.f32 %v715
        %vm743 = vweird.f32 %v737
        %vm744 = vmor %vm742, %vm743
        %v745 = vsel %vm744, %v737, %v741
        %v746 = vand.u32 2147483647, %v715
        %vm747 = vcmp.eq.f32.partialorder %v746, 8.507059e+37
        %v748 = vand.u32 %v715, 2147483648
        %v749 = vor.u32 1.1754944e-38, %v748
        %v750 = vsel %vm747, %v749, %v745
        %v751 = vmul.f32 %v698, %v750
        %v752 = vrcp.pop %v718
        %v753 = vmul.f32 %v718, %v752
        %v754 = vsub.f32 1.0, %v753
        %v755 = vmul.f32 %v752, %v754
        %v756 = vadd.f32 %v752, %v755
        %vm757 = vweird.f32 %v718
        %vm758 = vweird.f32 %v752
        %vm759 = vmor %vm757, %vm758
        %v760 = vsel %vm759, %v752, %v756
        %v761 = vand.u32 2147483647, %v718
        %vm762 = vcmp.eq.f32.partialorder %v761, 8.507059e+37
        %v763 = vand.u32 %v718, 2147483648
        %v764 = vor.u32 1.1754944e-38, %v763
        %v765 = vsel %vm762, %v764, %v760
        %v766 = vmul.f32 %v700, %v765
        %v767 = vrcp.pop %v721
        %v768 = vmul.f32 %v721, %v767
        %v769 = vsub.f32 1.0, %v768
        %v770 = vmul.f32 %v767, %v769
        %v771 = vadd.f32 %v767, %v770
        %vm772 = vweird.f32 %v721
        %vm773 = vweird.f32 %v767
        %vm774 = vmor %vm772, %vm773
        %v775 = vsel %vm774, %v767, %v771
        %v776 = vand.u32 2147483647, %v721
        %vm777 = vcmp.eq.f32.partialorder %v776, 8.507059e+37
        %v778 = vand.u32 %v721, 2147483648
        %v779 = vor.u32 1.1754944e-38, %v778
        %v780 = vsel %vm777, %v779, %v775
        %v781 = vmul.f32 %v702, %v780
        %v782 = vrcp.pop %v724
        %v783 = vmul.f32 %v724, %v782
        %v784 = vsub.f32 1.0, %v783
        %v785 = vmul.f32 %v782, %v784
        %v786 = vadd.f32 %v782, %v785
        %vm787 = vweird.f32 %v724
        %vm788 = vweird.f32 %v782
        %vm789 = vmor %vm787, %vm788
        %v790 = vsel %vm789, %v782, %v786
        %v791 = vand.u32 2147483647, %v724
        %vm792 = vcmp.eq.f32.partialorder %v791, 8.507059e+37
        %v793 = vand.u32 %v724, 2147483648
        %v794 = vor.u32 1.1754944e-38, %v793
        %v795 = vsel %vm792, %v794, %v790
        %v796 = vmul.f32 %v704, %v795
        %v797 = vrcp.pop %v727
        %v798 = vmul.f32 %v727, %v797
        %v799 = vsub.f32 1.0, %v798
        %v800 = vmul.f32 %v797, %v799
        %v801 = vadd.f32 %v797, %v800
        %vm802 = vweird.f32 %v727
        %vm803 = vweird.f32 %v797
        %vm804 = vmor %vm802, %vm803
        %v805 = vsel %vm804, %v797, %v801
        %v806 = vand.u32 2147483647, %v727
        %vm807 = vcmp.eq.f32.partialorder %v806, 8.507059e+37
        %v808 = vand.u32 %v727, 2147483648
        %v809 = vor.u32 1.1754944e-38, %v808
        %v810 = vsel %vm807, %v809, %v805
        %v811 = vmul.f32 %v706, %v810
        %v812 = vrcp.pop %v730
        %v813 = vmul.f32 %v730, %v812
        %v814 = vsub.f32 1.0, %v813
        %v815 = vmul.f32 %v812, %v814
        %v816 = vadd.f32 %v812, %v815
        %vm817 = vweird.f32 %v730
        %vm818 = vweird.f32 %v812
        %vm819 = vmor %vm817, %vm818
        %v820 = vsel %vm819, %v812, %v816
        %v821 = vand.u32 2147483647, %v730
        %vm822 = vcmp.eq.f32.partialorder %v821, 8.507059e+37
        %v823 = vand.u32 %v730, 2147483648
        %v824 = vor.u32 1.1754944e-38, %v823
        %v825 = vsel %vm822, %v824, %v820
        %v826 = vmul.f32 %v708, %v825
        %v827 = vrcp.pop %v733
        %v828 = vmul.f32 %v733, %v827
        %v829 = vsub.f32 1.0, %v828
        %v830 = vmul.f32 %v827, %v829
        %v831 = vadd.f32 %v827, %v830
        %vm832 = vweird.f32 %v733
        %vm833 = vweird.f32 %v827
        %vm834 = vmor %vm832, %vm833
        %v835 = vsel %vm834, %v827, %v831
        %v836 = vand.u32 2147483647, %v733
        %vm837 = vcmp.eq.f32.partialorder %v836, 8.507059e+37
        %v838 = vand.u32 %v733, 2147483648
        %v839 = vor.u32 1.1754944e-38, %v838
        %v840 = vsel %vm837, %v839, %v835
        %v841 = vmul.f32 %v710, %v840
        %v842 = vrcp.pop %v736
        %v843 = vmul.f32 %v736, %v842
        %v844 = vsub.f32 1.0, %v843
        %v845 = vmul.f32 %v842, %v844
        %v846 = vadd.f32 %v842, %v845
        %vm847 = vweird.f32 %v736
        %vm848 = vweird.f32 %v842
        %vm849 = vmor %vm847, %vm848
        %v850 = vsel %vm849, %v842, %v846
        %v851 = vand.u32 2147483647, %v736
        %vm852 = vcmp.eq.f32.partialorder %v851, 8.507059e+37
        %v853 = vand.u32 %v736, 2147483648
        %v854 = vor.u32 1.1754944e-38, %v853
        %v855 = vsel %vm852, %v854, %v850
        %v856 = vmul.f32 %v712, %v855
        %857 = vst.msk [vmem:[%s245] sm:$0xff] %vm664, %v751
        %858 = vst.msk [vmem:[%s245 + $0x8] sm:$0xff] %vm664, %v766
        %859 = vst.msk [vmem:[%s245 + $0x10] sm:$0xff] %vm664, %v781
        %860 = vst.msk [vmem:[%s245 + $0x18] sm:$0xff] %vm664, %v796
        %861 = vst.msk [vmem:[%s245 + $0x20] sm:$0xff] %vm664, %v811
        %862 = vst.msk [vmem:[%s245 + $0x28] sm:$0xff] %vm664, %v826
        %863 = vst.msk [vmem:[%s245 + $0x30] sm:$0xff] %vm664, %v841
        %864 = vst.msk [vmem:[%s245 + $0x38] sm:$0xff] %vm664, %v856
        %v865 = vpack.c.bf16 %v766, %v751
        %v866 = vpack.c.bf16 %v796, %v781
        %v867 = vpack.c.bf16 %v826, %v811
        %v868 = vpack.c.bf16 %v856, %v841
        %v877 = vunpack.c.l.b16 %v579
        %v878 = vunpack.c.l.b16 %v580
        %v879 = vunpack.c.l.b16 %v581
        %v880 = vunpack.c.l.b16 %v582
        %v881 = vunpack.c.l.b16 %v583
        %v882 = vunpack.c.l.b16 %v584
        %v883 = vunpack.c.l.b16 %v585
        %v884 = vunpack.c.l.b16 %v586
        %v885 = vpack.c.b16 %v878, %v877
        %v886 = vpack.c.b16 %v880, %v879
        %v887 = vpack.c.b16 %v882, %v881
        %v888 = vpack.c.b16 %v884, %v883
        %v894 = vsel %vm664, %v865, 0
        %v897 = vsel %vm664, %v866, 0
        %v900 = vsel %vm664, %v867, 0
        %v903 = vsel %vm664, %v868, 0
        %905 = vmatpush.bf16.msra.mxu0 0
        %906 = vmatpush.bf16.msra.mxu0 0
        %907 = vmatpush.bf16.msra.mxu0 0
        %908 = vmatpush.bf16.msra.mxu0 0
        %909 = vmatpush.bf16.msra.mxu0 %v888
        %910 = vmatpush.bf16.msra.mxu0 %v887
        %911 = vmatpush.bf16.msra.mxu0 %v886
        %912 = vmatpush.bf16.msra.mxu0 %v885
        %913 = vmatmul.bf16.gmra.mxu0 %v894
        %v914 = vpop.f32.mrf.mxu0
        %v915 = vadd.f32 0.0, %v914
        %v916 = vpop.f32.mrf.mxu0
        %v917 = vadd.f32 0.0, %v916
        %918 = vmatmul.bf16.gmra.mxu0 %v897
        %v919 = vpop.f32.mrf.mxu0
        %v920 = vadd.f32 0.0, %v919
        %v921 = vpop.f32.mrf.mxu0
        %v922 = vadd.f32 0.0, %v921
        %923 = vmatmul.bf16.gmra.mxu0 %v900
        %v924 = vpop.f32.mrf.mxu0
        %v925 = vadd.f32 0.0, %v924
        %v926 = vpop.f32.mrf.mxu0
        %v927 = vadd.f32 0.0, %v926
        %928 = vmatmul.bf16.gmra.mxu0 %v903
        %v929 = vpop.f32.mrf.mxu0
        %v930 = vadd.f32 0.0, %v929
        %v931 = vpop.f32.mrf.mxu0
        %v932 = vadd.f32 0.0, %v931
        %933 = vdwg.mxu0
        %s934 = scalar_lea.vmem %s250, %s557
        %v935 = vld [vmem:[%s934] sm:$0xff]
        %v936 = vld [vmem:[%s934 + $0x8] sm:$0xff]
        %v937 = vld [vmem:[%s934 + $0x10] sm:$0xff]
        %v938 = vld [vmem:[%s934 + $0x18] sm:$0xff]
        %v939 = vld [vmem:[%s934 + $0x20] sm:$0xff]
        %v940 = vld [vmem:[%s934 + $0x28] sm:$0xff]
        %v941 = vld [vmem:[%s934 + $0x30] sm:$0xff]
        %v942 = vld [vmem:[%s934 + $0x38] sm:$0xff]
        %s943 = sld [smem:[#allocation3]]
        %v944 = vstv %s943
        %v945 = vmul.f32 %v944, %v915
        %v946 = vmul.f32 %v944, %v917
        %v947 = vmul.f32 %v944, %v920
        %v948 = vmul.f32 %v944, %v922
        %v949 = vmul.f32 %v944, %v925
        %v950 = vmul.f32 %v944, %v927
        %v951 = vmul.f32 %v944, %v930
        %v952 = vmul.f32 %v944, %v932
        %v953 = vadd.f32 %v945, %v935
        %v954 = vadd.f32 %v946, %v936
        %v955 = vadd.f32 %v947, %v937
        %v956 = vadd.f32 %v948, %v938
        %v957 = vadd.f32 %v949, %v939
        %v958 = vadd.f32 %v950, %v940
        %v959 = vadd.f32 %v951, %v941
        %v960 = vadd.f32 %v952, %v942
        %961 = vst [vmem:[%s238] sm:$0xff] %v953
        %962 = vst [vmem:[%s238 + $0x8] sm:$0xff] %v954
        %963 = vst [vmem:[%s238 + $0x10] sm:$0xff] %v955
        %964 = vst [vmem:[%s238 + $0x18] sm:$0xff] %v956
        %965 = vst [vmem:[%s238 + $0x20] sm:$0xff] %v957
        %966 = vst [vmem:[%s238 + $0x28] sm:$0xff] %v958
        %967 = vst [vmem:[%s238 + $0x30] sm:$0xff] %v959
        %968 = vst [vmem:[%s238 + $0x38] sm:$0xff] %v960
        %s969 = sand.u32 %s135, 1
        %s970 = scalar_lea.sflag [#allocation5], %s969
        %s971 = sand.u32 %s135, 1
        %s972 = smul.addr %s971, 64
        %s973 = scalar_lea.vmem [#allocation4], %s972
        %s974 = sand.u32 %s163, 1
        %s975 = scalar_lea.sflag [#allocation7], %s974
        %s976 = sand.u32 %s163, 1
        %s977 = smul.addr %s976, 64
        %s978 = scalar_lea.vmem [#allocation6], %s977
        // Predicated region
        $region41: #{attn_forward.1} parent=35 // pred_check
          %p979 = pneg %p145
        $region42: #{attn_forward.1} parent=35 // pred_check_branch
          %981 = sbr.rel (%p979) target = $region44
        $region43: #{attn_forward.1} parent=35 // pred_region
          %s982 = smul.u32 8, %s29
          %984 = vsyncadd %s970, 0
          %s985 = smul.addr %s28, 8
          %s986 = sadd.s32 %s982, %s985
          %s987 = smul.addr %s986, 8
          %s988 = scalar_lea.hbm %s4, %s987
          %s989 = sshll.u32 %s973, 4
          %s990 = int_to_ptr.vmem [resolvable:$true] %s989
          %s991 = sshll.u32 %s988, 4
          %s992 = int_to_ptr.hbm [resolvable:$true] %s991
          %997 = dma.vmem_to_hbm [thread:$0]  %s990, 1024, %s992, %s970, 128, 128, 8
        $region44: #{attn_forward.1} parent=35 // pred_fallthru
          _
        // Predicated region
        $region45: #{attn_forward.1} parent=35 // pred_check
          %p998 = pneg %p173
        $region46: #{attn_forward.1} parent=35 // pred_check_branch
          %1000 = sbr.rel (%p998) target = $region48
        $region47: #{attn_forward.1} parent=35 // pred_region
          %s1001 = smul.u32 8, %s29
          %1003 = vsyncadd %s975, 0
          %s1004 = smul.addr %s28, 8
          %s1005 = sadd.s32 %s1001, %s1004
          %s1006 = smul.addr %s1005, 8
          %s1007 = scalar_lea.hbm %s5, %s1006
          %s1008 = sshll.u32 %s978, 4
          %s1009 = int_to_ptr.vmem [resolvable:$true] %s1008
          %s1010 = sshll.u32 %s1007, 4
          %s1011 = int_to_ptr.hbm [resolvable:$true] %s1010
          %1016 = dma.vmem_to_hbm [thread:$0]  %s1009, 1024, %s1011, %s975, 128, 128, 8
        $region48: #{attn_forward.1} parent=35 // pred_fallthru
          _
      $region36: #{attn_forward.1} parent=5 // pred_fallthru
        _
      %p1017 = scmp.le.s32.totalorder 2, %s19
      // Predicated region
      $region49: #{attn_forward.1} parent=5 // pred_check
        %p1018 = pneg %p1017
      $region50: #{attn_forward.1} parent=5 // pred_check_branch
        %1020 = sbr.rel (%p1018) target = $region52
      $region51: #{attn_forward.1} parent=5 // pred_region
        %s1021 = ssub.s32 %s19, 2
        // Predicated region
        $region53: #{attn_forward.1} parent=51 // pred_check
          %p1022 = pneg %p151
        $region54: #{attn_forward.1} parent=51 // pred_check_branch
          %1024 = sbr.rel (%p1022) target = $region56
        $region55: #{attn_forward.1} parent=51 // pred_region
          %s1025 = sand.u32 %s136, 1
          %s1026 = scalar_lea.sflag [#allocation5], %s1025
          %s1027 = sand.u32 %s136, 1
          %s1028 = smul.addr %s1027, 64
          %s1029 = scalar_lea.vmem [#allocation4], %s1028
          %1031 = dma.done %s1026, 1024
        $region56: #{attn_forward.1} parent=51 // pred_fallthru
          _
        // Predicated region
        $region57: #{attn_forward.1} parent=51 // pred_check
          %p1032 = pneg %p179
        $region58: #{attn_forward.1} parent=51 // pred_check_branch
          %1034 = sbr.rel (%p1032) target = $region60
        $region59: #{attn_forward.1} parent=51 // pred_region
          %s1035 = sand.u32 %s164, 1
          %s1036 = scalar_lea.sflag [#allocation7], %s1035
          %s1037 = sand.u32 %s164, 1
          %s1038 = smul.addr %s1037, 64
          %s1039 = scalar_lea.vmem [#allocation6], %s1038
          %1041 = dma.done %s1036, 1024
        $region60: #{attn_forward.1} parent=51 // pred_fallthru
          _
      $region52: #{attn_forward.1} parent=5 // pred_fallthru
        _
    $region6: #{attn_forward.1} parent=1 // loop_footer
      %s23 = sadd.s32 1, %s19
    $region7: #{attn_forward.1} parent=1 // loop_footer_branch
      %18 = sbr.rel target = $region3
    $region8: #{attn_forward.1} parent=1 // loop_exit
      _
    %1042 = vsyncpa [#allocation5], 1
    %s1043 = scalar_lea.sflag [#allocation5], 1
    %1044 = vsyncpa %s1043, 1
    %1045 = vsyncpa [#allocation7], 1
    %s1046 = scalar_lea.sflag [#allocation7], 1
    %1047 = vsyncpa %s1046, 1

</llo_original>
